<compile_context>
chip_gen: v5e
topology: v5e:2x2
jax: 0.10.0
libtpu: 0.0.40
codegen_flags: <defaults>
</compile_context>

<pallas_src>
from functools import partial

import jax
import jax.numpy as jnp
from jax import lax
from jax.experimental import pallas as pl
from jax.experimental.pallas import tpu as pltpu

EPS = 1e-5
LANE = 128


def _stats_kernel(n_ref, x_ref, w1_ref, b1_ref, w2_ref, gamma_ref, beta_ref,
                  acc_ref):
    """Pass 1: per-feature sum / sum-of-squares of h2 over the full batch.

    At the last grid step the accumulator is overwritten with the folded
    BatchNorm affine: column 0 = scale = gamma * rsqrt(var + eps),
    column 1 = shift = beta - mean * scale.
    """
    i = pl.program_id(0)
    tile = x_ref.shape[1]

    @pl.when(i == 0)
    def _init():
        acc_ref[...] = jnp.zeros_like(acc_ref)

    x = x_ref[...]                                                    # (4, T)
    h1 = jnp.maximum(
        jnp.dot(w1_ref[...], x, preferred_element_type=jnp.float32)
        + b1_ref[...], 0.0)                                           # (32, T)
    # b2 omitted: cancelled exactly by the BatchNorm mean subtraction.
    h2 = jnp.dot(w2_ref[...], h1, preferred_element_type=jnp.float32)  # (32, T)

    # Mask padded batch columns out of the statistics.
    col = lax.broadcasted_iota(jnp.int32, h2.shape, 1)
    valid = col < (n_ref[0] - i * tile)
    h2m = jnp.where(valid, h2, 0.0)

    acc_ref[:, 0:1] += jnp.sum(h2m, axis=1, keepdims=True)
    acc_ref[:, 1:2] += jnp.sum(h2m * h2m, axis=1, keepdims=True)

    @pl.when(i == pl.num_programs(0) - 1)
    def _finalize():
        n_f = n_ref[0].astype(jnp.float32)
        mean = acc_ref[:, 0:1] / n_f
        var = acc_ref[:, 1:2] / n_f - mean * mean                     # biased
        scale = gamma_ref[...] * lax.rsqrt(var + EPS)
        shift = beta_ref[...] - mean * scale
        acc_ref[:, 0:1] = scale
        acc_ref[:, 1:2] = shift


def _out_kernel(x_ref, w1_ref, b1_ref, w2_ref, ss_ref, w4_ref, b4_ref, o_ref):
    """Pass 2: recompute layer1/layer2, BN as one FMA, ReLU, layer4, sigmoid*2."""
    x = x_ref[...]                                                    # (4, T)
    h1 = jnp.maximum(
        jnp.dot(w1_ref[...], x, preferred_element_type=jnp.float32)
        + b1_ref[...], 0.0)                                           # (32, T)
    h2 = jnp.dot(w2_ref[...], h1, preferred_element_type=jnp.float32)
    h2n = jnp.maximum(h2 * ss_ref[:, 0:1] + ss_ref[:, 1:2], 0.0)      # BN + ReLU
    out = (jnp.dot(w4_ref[...], h2n, preferred_element_type=jnp.float32)
           + b4_ref[...])                                             # (2, T)
    o_ref[...] = 2.0 * jax.nn.sigmoid(out)


@partial(jax.jit, static_argnames=("tile",))
def fully_connected_forward(x, params, tile=512):
    """x: (N, 4) float32. params: dict (weights stored (out_feat, in_feat)).
    Returns (N, 2) float32."""
    n = x.shape[0]
    n_pad = ((n + LANE - 1) // LANE) * LANE          # lane-align the batch
    tile = min(tile, n_pad)
    if n_pad % tile != 0:
        n_pad = ((n_pad + tile - 1) // tile) * tile
    num_tiles = n_pad // tile

    # Batch on lanes: (4, N_pad), zero-padded columns.
    xt = jnp.pad(x.astype(jnp.float32), ((0, n_pad - n), (0, 0))).T
    n_arr = jnp.array([n], jnp.int32)

    w1, b1 = params["w1"], params["b1"]              # (32, 4), (32, 1)
    w2 = params["w2"]                                # (32, 32)   (b2 not needed)
    gamma, beta = params["gamma"], params["beta"]    # (32, 1), (32, 1)
    w4, b4 = params["w4"], params["b4"]              # (2, 32), (2, 1)

    # ---- Pass 1: batch statistics -> folded (scale, shift), shape (32, 2) ----
    const1 = lambda a: pl.BlockSpec(a.shape, lambda i, n_sm: (0, 0))
    scale_shift = pl.pallas_call(
        _stats_kernel,
        out_shape=jax.ShapeDtypeStruct((32, 2), jnp.float32),
        grid_spec=pltpu.PrefetchScalarGridSpec(
            num_scalar_prefetch=1,
            grid=(num_tiles,),
            in_specs=[pl.BlockSpec((4, tile), lambda i, n_sm: (0, i)),
                      const1(w1), const1(b1), const1(w2),
                      const1(gamma), const1(beta)],
            out_specs=pl.BlockSpec((32, 2), lambda i, n_sm: (0, 0)),
        ),
        compiler_params=pltpu.CompilerParams(
            dimension_semantics=("arbitrary",)),
    )(n_arr, xt, w1, b1, w2, gamma, beta)

    # ---- Pass 2: normalize + layer4, tile-parallel across both cores --------
    const2 = lambda a: pl.BlockSpec(a.shape, lambda i: (0, 0))
    out_t = pl.pallas_call(
        _out_kernel,
        out_shape=jax.ShapeDtypeStruct((2, n_pad), jnp.float32),
        grid=(num_tiles,),
        in_specs=[pl.BlockSpec((4, tile), lambda i: (0, i)),
                  const2(w1), const2(b1), const2(w2), const2(scale_shift),
                  const2(w4), const2(b4)],
        out_specs=pl.BlockSpec((2, tile), lambda i: (0, i)),
        compiler_params=pltpu.CompilerParams(
            dimension_semantics=("parallel",)),
    )(xt, w1, b1, w2, scale_shift, w4, b4)

    return out_t[:, :n].T                            # (N, 2)


def init_params(key):
    """Deterministic synthetic parameters matching the module's shapes.
    Weights are stored (out_features, in_features) like torch.nn.Linear."""
    ks = jax.random.split(key, 6)
    s1 = 1.0 / jnp.sqrt(4.0)
    s2 = 1.0 / jnp.sqrt(32.0)
    return {
        "w1": jax.random.uniform(ks[0], (32, 4), jnp.float32, -s1, s1),
        "b1": jax.random.uniform(ks[1], (32, 1), jnp.float32, -s1, s1),
        "w2": jax.random.uniform(ks[2], (32, 32), jnp.float32, -s2, s2),
        "b2": jax.random.uniform(ks[3], (32, 1), jnp.float32, -s2, s2),
        "gamma": jnp.ones((32, 1), jnp.float32),     # BatchNorm1d weight init
        "beta": jnp.zeros((32, 1), jnp.float32),     # BatchNorm1d bias init
        "w4": jax.random.uniform(ks[4], (2, 32), jnp.float32, -s2, s2),
        "b4": jax.random.uniform(ks[5], (2, 1), jnp.float32, -s2, s2),
    }


def reference_forward(x, p):
    """Plain-JAX reference (keeps b2 to verify it cancels in BatchNorm)."""
    h1 = jnp.maximum(x @ p["w1"].T + p["b1"].T, 0.0)
    h2 = h1 @ p["w2"].T + p["b2"].T
    mean = jnp.mean(h2, axis=0, keepdims=True)
    var = jnp.mean((h2 - mean) ** 2, axis=0, keepdims=True)
    h2n = jnp.maximum((h2 - mean) / jnp.sqrt(var + EPS) * p["gamma"].T
                      + p["beta"].T, 0.0)
    return 2.0 * jax.nn.sigmoid(h2n @ p["w4"].T + p["b4"].T)


if __name__ == "__main__":
    key = jax.random.PRNGKey(0)
    k_x, k_x2, k_p = jax.random.split(key, 3)
    params = init_params(k_p)

    # Small case (grid = 1 tile, padded/masked batch columns).
    batch = 8
    x = jax.random.normal(k_x, (batch, 4), jnp.float32)
    out = jax.block_until_ready(fully_connected_forward(x, params))
    ref = reference_forward(x, params)
    assert out.shape == (batch, 2), out.shape
    assert jnp.allclose(out, ref, atol=1e-4, rtol=1e-4), \
        float(jnp.max(jnp.abs(out - ref)))

    # Larger, non-tile-multiple case (exercises multi-tile two-pass BatchNorm).
    batch2 = 777
    x2 = jax.random.normal(k_x2, (batch2, 4), jnp.float32)
    out2 = jax.block_until_ready(fully_connected_forward(x2, params))
    ref2 = reference_forward(x2, params)
    assert out2.shape == (batch2, 2), out2.shape
    assert jnp.allclose(out2, ref2, atol=1e-4, rtol=1e-4), \
        float(jnp.max(jnp.abs(out2 - ref2)))

    print("KERNEL_OK")
</pallas_src>

<mosaic_0001>
module attributes {stable_mosaic.version = 11 : i64} {
  func.func @_stats_kernel(%arg0: i32, %arg1: memref<1xi32, #tpu.memory_space<smem>>, %arg2: memref<4x128xf32, #tpu.memory_space<vmem>>, %arg3: memref<32x4xf32, #tpu.memory_space<vmem>>, %arg4: memref<32x1xf32, #tpu.memory_space<vmem>>, %arg5: memref<32x32xf32, #tpu.memory_space<vmem>>, %arg6: memref<32x1xf32, #tpu.memory_space<vmem>>, %arg7: memref<32x1xf32, #tpu.memory_space<vmem>>, %arg8: memref<32x2xf32, #tpu.memory_space<vmem>>) attributes {dimension_semantics = [#tpu.dimension_semantics<arbitrary>], iteration_bounds = array<i64: 1>, scalar_prefetch = 1 : i64, scratch_operands = 0 : i64, tpu.core_type = #tpu.core_type<tc>, window_params = [{transform_indices = @transform_0, window_bounds = array<i64: 4, 128>}, {pipeline_mode = #tpu.pipeline_mode<synchronous>, transform_indices = @transform_1, window_bounds = array<i64: 32, 4>}, {pipeline_mode = #tpu.pipeline_mode<synchronous>, transform_indices = @transform_2, window_bounds = array<i64: 32, 1>}, {pipeline_mode = #tpu.pipeline_mode<synchronous>, transform_indices = @transform_3, window_bounds = array<i64: 32, 32>}, {pipeline_mode = #tpu.pipeline_mode<synchronous>, transform_indices = @transform_4, window_bounds = array<i64: 32, 1>}, {pipeline_mode = #tpu.pipeline_mode<synchronous>, transform_indices = @transform_5, window_bounds = array<i64: 32, 1>}, {pipeline_mode = #tpu.pipeline_mode<synchronous>, transform_indices = @transform_6, window_bounds = array<i64: 32, 2>}]} {
    %c0_i32 = arith.constant 0 : i32
    %0 = arith.cmpi eq, %arg0, %c0_i32 : i32
    %1 = arith.extui %0 : i1 to i32
    %c0_i32_0 = arith.constant 0 : i32
    %2 = arith.cmpi ne, %1, %c0_i32_0 : i32
    scf.if %2 {
      %cst_23 = arith.constant 0.000000e+00 : f32
      %35 = vector.broadcast %cst_23 : f32 to vector<32x2xf32>
      %c0_24 = arith.constant 0 : index
      %c0_25 = arith.constant 0 : index
      %36 = vector.load %arg8[%c0_24, %c0_25] : memref<32x2xf32, #tpu.memory_space<vmem>>, vector<32x2xf32>
      tpu.vector_store %arg8[%c0_24, %c0_25], %35 {strides = array<i32>} : memref<32x2xf32, #tpu.memory_space<vmem>>, vector<32x2xf32>,
    } else {
    }
    %c0 = arith.constant 0 : index
    %c0_1 = arith.constant 0 : index
    %3 = vector.load %arg2[%c0, %c0_1] : memref<4x128xf32, #tpu.memory_space<vmem>>, vector<4x128xf32>
    %c0_2 = arith.constant 0 : index
    %c0_3 = arith.constant 0 : index
    %4 = vector.load %arg3[%c0_2, %c0_3] : memref<32x4xf32, #tpu.memory_space<vmem>>, vector<32x4xf32>
    %cst = arith.constant dense<0.000000e+00> : vector<32x128xf32>
    %5 = tpu.matmul %4, %3, %cst {dimension_numbers = #tpu.dot_dimension_numbers<[1], [0], [0], [1], [0, 0, 1, 1], [], []>} : vector<32x4xf32>, vector<4x128xf32>, vector<32x128xf32> -> vector<32x128xf32>
    %c0_4 = arith.constant 0 : index
    %c0_5 = arith.constant 0 : index
    %6 = vector.load %arg4[%c0_4, %c0_5] : memref<32x1xf32, #tpu.memory_space<vmem>>, vector<32x1xf32>
    %7 = vector.broadcast %6 : vector<32x1xf32> to vector<32x128xf32>
    %8 = arith.addf %5, %7 : vector<32x128xf32>
    %cst_6 = arith.constant 0.000000e+00 : f32
    %9 = vector.broadcast %cst_6 : f32 to vector<32x128xf32>
    %10 = arith.maximumf %8, %9 : vector<32x128xf32>
    %c0_7 = arith.constant 0 : index
    %c0_8 = arith.constant 0 : index
    %11 = vector.load %arg5[%c0_7, %c0_8] : memref<32x32xf32, #tpu.memory_space<vmem>>, vector<32x32xf32>
    %cst_9 = arith.constant dense<0.000000e+00> : vector<32x128xf32>
    %12 = tpu.matmul %11, %10, %cst_9 {dimension_numbers = #tpu.dot_dimension_numbers<[1], [0], [0], [1], [0, 0, 1, 1], [], []>} : vector<32x32xf32>, vector<32x128xf32>, vector<32x128xf32> -> vector<32x128xf32>
    %13 = tpu.iota {dimensions = array<i32: 1>} : vector<32x128xi32>
    %c0_10 = arith.constant 0 : index
    %14 = memref.load %arg1[%c0_10] : memref<1xi32, #tpu.memory_space<smem>>
    %c128_i32 = arith.constant 128 : i32
    %15 = arith.muli %arg0, %c128_i32 : i32
    %16 = arith.subi %14, %15 : i32
    %17 = vector.broadcast %16 : i32 to vector<32x128xi32>
    %18 = arith.cmpi slt, %13, %17 : vector<32x128xi32>
    %cst_11 = arith.constant 0.000000e+00 : f32
    %19 = vector.broadcast %cst_11 : f32 to vector<32x128xf32>
    %20 = arith.select %18, %12, %19 : vector<32x128xi1>, vector<32x128xf32>
    %c0_12 = arith.constant 0 : index
    %c0_13 = arith.constant 0 : index
    %21 = vector.load %arg8[%c0_12, %c0_13] : memref<32x2xf32, #tpu.memory_space<vmem>>, vector<32x1xf32>
    %cst_14 = arith.constant dense<0.000000e+00> : vector<32xf32>
    %22 = vector.multi_reduction <add>, %20, %cst_14 [1] : vector<32x128xf32> to vector<32xf32>
    %23 = vector.shape_cast %22 : vector<32xf32> to vector<32x1xf32>
    %24 = arith.addf %21, %23 : vector<32x1xf32>
    %c0_15 = arith.constant 0 : index
    %c0_16 = arith.constant 0 : index
    %25 = vector.load %arg8[%c0_15, %c0_16] : memref<32x2xf32, #tpu.memory_space<vmem>>, vector<32x1xf32>
    tpu.vector_store %arg8[%c0_15, %c0_16], %24 {strides = array<i32>} : memref<32x2xf32, #tpu.memory_space<vmem>>, vector<32x1xf32>,
    %c0_17 = arith.constant 0 : index
    %c1 = arith.constant 1 : index
    %26 = vector.load %arg8[%c0_17, %c1] : memref<32x2xf32, #tpu.memory_space<vmem>>, vector<32x1xf32>
    %27 = arith.mulf %20, %20 : vector<32x128xf32>
    %cst_18 = arith.constant dense<0.000000e+00> : vector<32xf32>
    %28 = vector.multi_reduction <add>, %27, %cst_18 [1] : vector<32x128xf32> to vector<32xf32>
    %29 = vector.shape_cast %28 : vector<32xf32> to vector<32x1xf32>
    %30 = arith.addf %26, %29 : vector<32x1xf32>
    %c0_19 = arith.constant 0 : index
    %c1_20 = arith.constant 1 : index
    %31 = vector.load %arg8[%c0_19, %c1_20] : memref<32x2xf32, #tpu.memory_space<vmem>>, vector<32x1xf32>
    tpu.vector_store %arg8[%c0_19, %c1_20], %30 {strides = array<i32>} : memref<32x2xf32, #tpu.memory_space<vmem>>, vector<32x1xf32>,
    %c0_i32_21 = arith.constant 0 : i32
    %32 = arith.cmpi eq, %arg0, %c0_i32_21 : i32
    %33 = arith.extui %32 : i1 to i32
    %c0_i32_22 = arith.constant 0 : i32
    %34 = arith.cmpi ne, %33, %c0_i32_22 : i32
    scf.if %34 {
      %c0_23 = arith.constant 0 : index
      %35 = memref.load %arg1[%c0_23] : memref<1xi32, #tpu.memory_space<smem>>
      %36 = arith.sitofp %35 : i32 to f32
      %c0_24 = arith.constant 0 : index
      %c0_25 = arith.constant 0 : index
      %37 = vector.load %arg8[%c0_24, %c0_25] : memref<32x2xf32, #tpu.memory_space<vmem>>, vector<32x1xf32>
      %38 = vector.broadcast %36 : f32 to vector<32x1xf32>
      %39 = arith.divf %37, %38 : vector<32x1xf32>
      %c0_26 = arith.constant 0 : index
      %c1_27 = arith.constant 1 : index
      %40 = vector.load %arg8[%c0_26, %c1_27] : memref<32x2xf32, #tpu.memory_space<vmem>>, vector<32x1xf32>
      %41 = vector.broadcast %36 : f32 to vector<32x1xf32>
      %42 = arith.divf %40, %41 : vector<32x1xf32>
      %43 = arith.mulf %39, %39 : vector<32x1xf32>
      %44 = arith.subf %42, %43 : vector<32x1xf32>
      %c0_28 = arith.constant 0 : index
      %c0_29 = arith.constant 0 : index
      %45 = vector.load %arg6[%c0_28, %c0_29] : memref<32x1xf32, #tpu.memory_space<vmem>>, vector<32x1xf32>
      %cst_30 = arith.constant 9.99999974E-6 : f32
      %46 = vector.broadcast %cst_30 : f32 to vector<32x1xf32>
      %47 = arith.addf %44, %46 : vector<32x1xf32>
      %48 = math.rsqrt %47 : vector<32x1xf32>
      %49 = arith.mulf %45, %48 : vector<32x1xf32>
      %c0_31 = arith.constant 0 : index
      %c0_32 = arith.constant 0 : index
      %50 = vector.load %arg7[%c0_31, %c0_32] : memref<32x1xf32, #tpu.memory_space<vmem>>, vector<32x1xf32>
      %51 = arith.mulf %39, %49 : vector<32x1xf32>
      %52 = arith.subf %50, %51 : vector<32x1xf32>
      %c0_33 = arith.constant 0 : index
      %c0_34 = arith.constant 0 : index
      %53 = vector.load %arg8[%c0_33, %c0_34] : memref<32x2xf32, #tpu.memory_space<vmem>>, vector<32x1xf32>
      tpu.vector_store %arg8[%c0_33, %c0_34], %49 {strides = array<i32>} : memref<32x2xf32, #tpu.memory_space<vmem>>, vector<32x1xf32>,
      %c0_35 = arith.constant 0 : index
      %c1_36 = arith.constant 1 : index
      %54 = vector.load %arg8[%c0_35, %c1_36] : memref<32x2xf32, #tpu.memory_space<vmem>>, vector<32x1xf32>
      tpu.vector_store %arg8[%c0_35, %c1_36], %52 {strides = array<i32>} : memref<32x2xf32, #tpu.memory_space<vmem>>, vector<32x1xf32>,
    } else {
    }
    return
  }
  func.func @transform_0(%arg0: i32, %arg1: memref<1xi32, #tpu.memory_space<smem>>) -> (i32, i32) {
    %c0_i32 = arith.constant 0 : i32
    %c0_i32_0 = arith.constant 0 : i32
    return %c0_i32, %arg0 : i32, i32
  }
  func.func @transform_1(%arg0: i32, %arg1: memref<1xi32, #tpu.memory_space<smem>>) -> (i32, i32) {
    %c0_i32 = arith.constant 0 : i32
    %c0_i32_0 = arith.constant 0 : i32
    %c0_i32_1 = arith.constant 0 : i32
    return %c0_i32, %c0_i32_0 : i32, i32
  }
  func.func @transform_2(%arg0: i32, %arg1: memref<1xi32, #tpu.memory_space<smem>>) -> (i32, i32) {
    %c0_i32 = arith.constant 0 : i32
    %c0_i32_0 = arith.constant 0 : i32
    %c0_i32_1 = arith.constant 0 : i32
    return %c0_i32, %c0_i32_0 : i32, i32
  }
  func.func @transform_3(%arg0: i32, %arg1: memref<1xi32, #tpu.memory_space<smem>>) -> (i32, i32) {
    %c0_i32 = arith.constant 0 : i32
    %c0_i32_0 = arith.constant 0 : i32
    %c0_i32_1 = arith.constant 0 : i32
    return %c0_i32, %c0_i32_0 : i32, i32
  }
  func.func @transform_4(%arg0: i32, %arg1: memref<1xi32, #tpu.memory_space<smem>>) -> (i32, i32) {
    %c0_i32 = arith.constant 0 : i32
    %c0_i32_0 = arith.constant 0 : i32
    %c0_i32_1 = arith.constant 0 : i32
    return %c0_i32, %c0_i32_0 : i32, i32
  }
  func.func @transform_5(%arg0: i32, %arg1: memref<1xi32, #tpu.memory_space<smem>>) -> (i32, i32) {
    %c0_i32 = arith.constant 0 : i32
    %c0_i32_0 = arith.constant 0 : i32
    %c0_i32_1 = arith.constant 0 : i32
    return %c0_i32, %c0_i32_0 : i32, i32
  }
  func.func @transform_6(%arg0: i32, %arg1: memref<1xi32, #tpu.memory_space<smem>>) -> (i32, i32) {
    %c0_i32 = arith.constant 0 : i32
    %c0_i32_0 = arith.constant 0 : i32
    %c0_i32_1 = arith.constant 0 : i32
    return %c0_i32, %c0_i32_0 : i32, i32
  }
}

module attributes {stable_mosaic.version = 11 : i64} {
  func.func @_out_kernel(%arg0: i32, %arg1: memref<4x128xf32, #tpu.memory_space<vmem>>, %arg2: memref<32x4xf32, #tpu.memory_space<vmem>>, %arg3: memref<32x1xf32, #tpu.memory_space<vmem>>, %arg4: memref<32x32xf32, #tpu.memory_space<vmem>>, %arg5: memref<32x2xf32, #tpu.memory_space<vmem>>, %arg6: memref<2x32xf32, #tpu.memory_space<vmem>>, %arg7: memref<2x1xf32, #tpu.memory_space<vmem>>, %arg8: memref<2x128xf32, #tpu.memory_space<vmem>>) attributes {dimension_semantics = [#tpu.dimension_semantics<parallel>], iteration_bounds = array<i64: 1>, scalar_prefetch = 0 : i64, scratch_operands = 0 : i64, tpu.core_type = #tpu.core_type<tc>, window_params = [{transform_indices = @transform_0, window_bounds = array<i64: 4, 128>}, {pipeline_mode = #tpu.pipeline_mode<synchronous>, transform_indices = @transform_1, window_bounds = array<i64: 32, 4>}, {pipeline_mode = #tpu.pipeline_mode<synchronous>, transform_indices = @transform_2, window_bounds = array<i64: 32, 1>}, {pipeline_mode = #tpu.pipeline_mode<synchronous>, transform_indices = @transform_3, window_bounds = array<i64: 32, 32>}, {pipeline_mode = #tpu.pipeline_mode<synchronous>, transform_indices = @transform_4, window_bounds = array<i64: 32, 2>}, {pipeline_mode = #tpu.pipeline_mode<synchronous>, transform_indices = @transform_5, window_bounds = array<i64: 2, 32>}, {pipeline_mode = #tpu.pipeline_mode<synchronous>, transform_indices = @transform_6, window_bounds = array<i64: 2, 1>}, {transform_indices = @transform_7, window_bounds = array<i64: 2, 128>}]} {
    %c0 = arith.constant 0 : index
    %c0_0 = arith.constant 0 : index
    %0 = vector.load %arg1[%c0, %c0_0] : memref<4x128xf32, #tpu.memory_space<vmem>>, vector<4x128xf32>
    %c0_1 = arith.constant 0 : index
    %c0_2 = arith.constant 0 : index
    %1 = vector.load %arg2[%c0_1, %c0_2] : memref<32x4xf32, #tpu.memory_space<vmem>>, vector<32x4xf32>
    %cst = arith.constant dense<0.000000e+00> : vector<32x128xf32>
    %2 = tpu.matmul %1, %0, %cst {dimension_numbers = #tpu.dot_dimension_numbers<[1], [0], [0], [1], [0, 0, 1, 1], [], []>} : vector<32x4xf32>, vector<4x128xf32>, vector<32x128xf32> -> vector<32x128xf32>
    %c0_3 = arith.constant 0 : index
    %c0_4 = arith.constant 0 : index
    %3 = vector.load %arg3[%c0_3, %c0_4] : memref<32x1xf32, #tpu.memory_space<vmem>>, vector<32x1xf32>
    %4 = vector.broadcast %3 : vector<32x1xf32> to vector<32x128xf32>
    %5 = arith.addf %2, %4 : vector<32x128xf32>
    %cst_5 = arith.constant 0.000000e+00 : f32
    %6 = vector.broadcast %cst_5 : f32 to vector<32x128xf32>
    %7 = arith.maximumf %5, %6 : vector<32x128xf32>
    %c0_6 = arith.constant 0 : index
    %c0_7 = arith.constant 0 : index
    %8 = vector.load %arg4[%c0_6, %c0_7] : memref<32x32xf32, #tpu.memory_space<vmem>>, vector<32x32xf32>
    %cst_8 = arith.constant dense<0.000000e+00> : vector<32x128xf32>
    %9 = tpu.matmul %8, %7, %cst_8 {dimension_numbers = #tpu.dot_dimension_numbers<[1], [0], [0], [1], [0, 0, 1, 1], [], []>} : vector<32x32xf32>, vector<32x128xf32>, vector<32x128xf32> -> vector<32x128xf32>
    %c0_9 = arith.constant 0 : index
    %c0_10 = arith.constant 0 : index
    %10 = vector.load %arg5[%c0_9, %c0_10] : memref<32x2xf32, #tpu.memory_space<vmem>>, vector<32x1xf32>
    %11 = vector.broadcast %10 : vector<32x1xf32> to vector<32x128xf32>
    %12 = arith.mulf %9, %11 : vector<32x128xf32>
    %c0_11 = arith.constant 0 : index
    %c1 = arith.constant 1 : index
    %13 = vector.load %arg5[%c0_11, %c1] : memref<32x2xf32, #tpu.memory_space<vmem>>, vector<32x1xf32>
    %14 = vector.broadcast %13 : vector<32x1xf32> to vector<32x128xf32>
    %15 = arith.addf %12, %14 : vector<32x128xf32>
    %cst_12 = arith.constant 0.000000e+00 : f32
    %16 = vector.broadcast %cst_12 : f32 to vector<32x128xf32>
    %17 = arith.maximumf %15, %16 : vector<32x128xf32>
    %c0_13 = arith.constant 0 : index
    %c0_14 = arith.constant 0 : index
    %18 = vector.load %arg6[%c0_13, %c0_14] : memref<2x32xf32, #tpu.memory_space<vmem>>, vector<2x32xf32>
    %cst_15 = arith.constant dense<0.000000e+00> : vector<2x128xf32>
    %19 = tpu.matmul %18, %17, %cst_15 {dimension_numbers = #tpu.dot_dimension_numbers<[1], [0], [0], [1], [0, 0, 1, 1], [], []>} : vector<2x32xf32>, vector<32x128xf32>, vector<2x128xf32> -> vector<2x128xf32>
    %c0_16 = arith.constant 0 : index
    %c0_17 = arith.constant 0 : index
    %20 = vector.load %arg7[%c0_16, %c0_17] : memref<2x1xf32, #tpu.memory_space<vmem>>, vector<2x1xf32>
    %21 = vector.broadcast %20 : vector<2x1xf32> to vector<2x128xf32>
    %22 = arith.addf %19, %21 : vector<2x128xf32>
    %23 = arith.negf %22 : vector<2x128xf32>
    %24 = math.exp %23 : vector<2x128xf32>
    %cst_18 = arith.constant 1.000000e+00 : f32
    %25 = vector.broadcast %cst_18 : f32 to vector<2x128xf32>
    %26 = arith.addf %25, %24 : vector<2x128xf32>
    %27 = arith.divf %25, %26 : vector<2x128xf32>
    %cst_19 = arith.constant 2.000000e+00 : f32
    %28 = vector.broadcast %cst_19 : f32 to vector<2x128xf32>
    %29 = arith.mulf %28, %27 : vector<2x128xf32>
    %c0_20 = arith.constant 0 : index
    %c0_21 = arith.constant 0 : index
    %30 = vector.load %arg8[%c0_20, %c0_21] : memref<2x128xf32, #tpu.memory_space<vmem>>, vector<2x128xf32>
    tpu.vector_store %arg8[%c0_20, %c0_21], %29 {strides = array<i32>} : memref<2x128xf32, #tpu.memory_space<vmem>>, vector<2x128xf32>,
    return
  }
  func.func @transform_0(%arg0: i32) -> (i32, i32) {
    %c0_i32 = arith.constant 0 : i32
    %c0_i32_0 = arith.constant 0 : i32
    return %c0_i32, %arg0 : i32, i32
  }
  func.func @transform_1(%arg0: i32) -> (i32, i32) {
    %c0_i32 = arith.constant 0 : i32
    %c0_i32_0 = arith.constant 0 : i32
    %c0_i32_1 = arith.constant 0 : i32
    return %c0_i32, %c0_i32_0 : i32, i32
  }
  func.func @transform_2(%arg0: i32) -> (i32, i32) {
    %c0_i32 = arith.constant 0 : i32
    %c0_i32_0 = arith.constant 0 : i32
    %c0_i32_1 = arith.constant 0 : i32
    return %c0_i32, %c0_i32_0 : i32, i32
  }
  func.func @transform_3(%arg0: i32) -> (i32, i32) {
    %c0_i32 = arith.constant 0 : i32
    %c0_i32_0 = arith.constant 0 : i32
    %c0_i32_1 = arith.constant 0 : i32
    return %c0_i32, %c0_i32_0 : i32, i32
  }
  func.func @transform_4(%arg0: i32) -> (i32, i32) {
    %c0_i32 = arith.constant 0 : i32
    %c0_i32_0 = arith.constant 0 : i32
    %c0_i32_1 = arith.constant 0 : i32
    return %c0_i32, %c0_i32_0 : i32, i32
  }
  func.func @transform_5(%arg0: i32) -> (i32, i32) {
    %c0_i32 = arith.constant 0 : i32
    %c0_i32_0 = arith.constant 0 : i32
    %c0_i32_1 = arith.constant 0 : i32
    return %c0_i32, %c0_i32_0 : i32, i32
  }
  func.func @transform_6(%arg0: i32) -> (i32, i32) {
    %c0_i32 = arith.constant 0 : i32
    %c0_i32_0 = arith.constant 0 : i32
    %c0_i32_1 = arith.constant 0 : i32
    return %c0_i32, %c0_i32_0 : i32, i32
  }
  func.func @transform_7(%arg0: i32) -> (i32, i32) {
    %c0_i32 = arith.constant 0 : i32
    %c0_i32_0 = arith.constant 0 : i32
    return %c0_i32, %arg0 : i32, i32
  }
}

</mosaic_0001>

<llo_original>
// kernel: fully_connected_forward.2
$region0: #{fully_connected_forward.2}
  #allocation0 [shape = 'u32[]', space=smem, size = 0x4, offset = 0x4, fixed_abs, tag = 'smem constant byte address 0x4 - core index']
  #allocation1 [shape = 'u32[72,128]{1,0:T(1,128)}', space=vmem, size = 0x9000, scoped, tag = 'internal scratch']
  #allocation2 [shape = 's32[1]{0}', space=sflag, size = 0x4, scoped, tag = 'scoped memory for fully_connected_forward.2']
  #allocation3 [shape = 's32[1]{0:T(128)S(6)}', space=smem, size = 0x200, scoped, tag = 'prefetched SMEM operand 0']
  %s0 = inlined_call_operand.<no memory space> [shape: s32[1], index: 0, kind: input, shape index: {}]
  %s1 = inlined_call_operand.vmem [shape: f32[4,128], index: 1, kind: input, shape index: {}]
  %s2 = inlined_call_operand.vmem [shape: f32[32,4], index: 2, kind: input, shape index: {}]
  %s3 = inlined_call_operand.vmem [shape: f32[32,1], index: 3, kind: input, shape index: {}]
  %s4 = inlined_call_operand.vmem [shape: f32[32,32], index: 4, kind: input, shape index: {}]
  %s5 = inlined_call_operand.vmem [shape: f32[32,1], index: 5, kind: input, shape index: {}]
  %s6 = inlined_call_operand.vmem [shape: f32[32,1], index: 6, kind: input, shape index: {}]
  %s7 = inlined_call_operand.vmem [shape: f32[32,2], index: 7, kind: output, shape index: {}]
  %s8 = sld [smem:[#allocation0]]
  $region42: #{fully_connected_forward.2} parent=0
    _
  %s10 = ssub.s32 1, %s8
  %s11 = scalar_select 0, %s10, %s8
  %12 = sst [smem:[#allocation3]] %s0
  // Predicated region
  $region2: #{fully_connected_forward.2} parent=0 // pred_check
    _
  $region3: #{fully_connected_forward.2} parent=0 // pred_check_branch
    %14 = sbr.rel (0) target = $region5
  $region4: #{fully_connected_forward.2} parent=0 // pred_region
    _
  $region5: #{fully_connected_forward.2} parent=0 // pred_fallthru
    _
  // Predicated region
  $region6: #{fully_connected_forward.2} parent=0 // pred_check
    _
  $region7: #{fully_connected_forward.2} parent=0 // pred_check_branch
    %16 = sbr.rel (0) target = $region9
  $region8: #{fully_connected_forward.2} parent=0 // pred_region
    _
  $region9: #{fully_connected_forward.2} parent=0 // pred_fallthru
    _
  // Predicated region
  $region10: #{fully_connected_forward.2} parent=0 // pred_check
    _
  $region11: #{fully_connected_forward.2} parent=0 // pred_check_branch
    %18 = sbr.rel (0) target = $region13
  $region12: #{fully_connected_forward.2} parent=0 // pred_region
    _
  $region13: #{fully_connected_forward.2} parent=0 // pred_fallthru
    _
  // Predicated region
  $region14: #{fully_connected_forward.2} parent=0 // pred_check
    _
  $region15: #{fully_connected_forward.2} parent=0 // pred_check_branch
    %20 = sbr.rel (0) target = $region17
  $region16: #{fully_connected_forward.2} parent=0 // pred_region
    _
  $region17: #{fully_connected_forward.2} parent=0 // pred_fallthru
    _
  // Predicated region
  $region18: #{fully_connected_forward.2} parent=0 // pred_check
    _
  $region19: #{fully_connected_forward.2} parent=0 // pred_check_branch
    %22 = sbr.rel (0) target = $region21
  $region20: #{fully_connected_forward.2} parent=0 // pred_region
    _
  $region21: #{fully_connected_forward.2} parent=0 // pred_fallthru
    _
  // Predicated region
  $region22: #{fully_connected_forward.2} parent=0 // pred_check
    _
  $region23: #{fully_connected_forward.2} parent=0 // pred_check_branch
    %24 = sbr.rel (0) target = $region25
  $region24: #{fully_connected_forward.2} parent=0 // pred_region
    _
  $region25: #{fully_connected_forward.2} parent=0 // pred_fallthru
    _
  %p25 = scmp.eq.s32.totalorder 0, 0
  // Predicated region
  $region26: #{fully_connected_forward.2} parent=0 // pred_check
    %p26 = pneg %p25
  $region27: #{fully_connected_forward.2} parent=0 // pred_check_branch
    %28 = sbr.rel (%p26) target = $region29
  $region28: #{fully_connected_forward.2} parent=0 // pred_region
    %vm29 = vcmask 15360
    %30 = vst.msk [vmem:[%s7] sm:$0xff] %vm29, 0.0
    %31 = vst.msk [vmem:[%s7 + $0x8] sm:$0xff] %vm29, 0.0
    %32 = vst.msk [vmem:[%s7 + $0x10] sm:$0xff] %vm29, 0.0
    %33 = vst.msk [vmem:[%s7 + $0x18] sm:$0xff] %vm29, 0.0
  $region29: #{fully_connected_forward.2} parent=0 // pred_fallthru
    _
  %v34 = vld [vmem:[%s1] sm:$0xf]
  %v35 = vld [vmem:[%s2] sm:$0xff]
  %v36 = vld [vmem:[%s2 + $0x8] sm:$0xff]
  %v37 = vld [vmem:[%s2 + $0x10] sm:$0xff]
  %v38 = vld [vmem:[%s2 + $0x18] sm:$0xff]
  %v39 = vld [vmem:[%s3] sm:$0xff]
  %v40 = vld [vmem:[%s3 + $0x8] sm:$0xff]
  %v41 = vld [vmem:[%s3 + $0x10] sm:$0xff]
  %v42 = vld [vmem:[%s3 + $0x18] sm:$0xff]
  %44 = vset.pattern.permute.xlu0 0
  %45 = vperm.xlu0 %44, %v39
  %v46 = vpop.permute.xlu0 %45
  %49 = vset.pattern.permute.xlu0 0
  %50 = vperm.xlu0 %49, %v40
  %v51 = vpop.permute.xlu0 %50
  %54 = vset.pattern.permute.xlu0 0
  %55 = vperm.xlu0 %54, %v41
  %v56 = vpop.permute.xlu0 %55
  %59 = vset.pattern.permute.xlu0 0
  %60 = vperm.xlu0 %59, %v42
  %v61 = vpop.permute.xlu0 %60
  %vm63 = vcmask 31744
  %v65 = vsel %vm63, %v35, 0
  %v68 = vsel %vm63, %v36, 0
  %v71 = vsel %vm63, %v37, 0
  %v74 = vsel %vm63, %v38, 0
  %vm76 = vcmask 1043456
  %v78 = vsel %vm76, %v34, 0
  %80 = vmatpush.msra.mxu0 0.0
  %81 = vmatpush.msra.mxu0 0.0
  %82 = vmatpush.msra.mxu0 0.0
  %83 = vmatpush.msra.mxu0 0.0
  %84 = vmatpush.msra.mxu0 0.0
  %85 = vmatpush.msra.mxu0 0.0
  %86 = vmatpush.msra.mxu0 0.0
  %87 = vmatpush.msra.mxu0 0.0
  %88 = vmatpush.msra.mxu0 0.0
  %89 = vmatpush.msra.mxu0 0.0
  %90 = vmatpush.msra.mxu0 0.0
  %91 = vmatpush.msra.mxu0 0.0
  %92 = vmatpush.msra.mxu0 0.0
  %93 = vmatpush.msra.mxu0 0.0
  %94 = vmatpush.msra.mxu0 0.0
  %95 = vmatpush.msra.mxu0 %v78
  %96 = vmatmul.f32.gmra.mxu0 %v65
  %v97 = vpop.f32.mrf.mxu0
  %v98 = vadd.f32 %v46, %v97
  %99 = vmatmul.f32.gmra.mxu0 %v68
  %v100 = vpop.f32.mrf.mxu0
  %v101 = vadd.f32 %v51, %v100
  %102 = vmatmul.f32.gmra.mxu0 %v71
  %v103 = vpop.f32.mrf.mxu0
  %v104 = vadd.f32 %v56, %v103
  %105 = vmatmul.f32.gmra.mxu0 %v74
  %v106 = vpop.f32.mrf.mxu0
  %v107 = vadd.f32 %v61, %v106
  %108 = vdwg.mxu0
  %v109 = vmax.f32 %v98, 0.0
  %v110 = vmax.f32 %v101, 0.0
  %v111 = vmax.f32 %v104, 0.0
  %v112 = vmax.f32 %v107, 0.0
  %v113 = vld [vmem:[%s4] sm:$0xff]
  %v114 = vld [vmem:[%s4 + $0x8] sm:$0xff]
  %v115 = vld [vmem:[%s4 + $0x10] sm:$0xff]
  %v116 = vld [vmem:[%s4 + $0x18] sm:$0xff]
  %vm117 = vcmask 261120
  %v119 = vsel %vm117, %v113, 0
  %v122 = vsel %vm117, %v114, 0
  %v125 = vsel %vm117, %v115, 0
  %v128 = vsel %vm117, %v116, 0
  %130 = vmatpush.msra.mxu0 0.0
  %131 = vmatpush.msra.mxu0 0.0
  %132 = vmatpush.msra.mxu0 0.0
  %133 = vmatpush.msra.mxu0 0.0
  %134 = vmatpush.msra.mxu0 0.0
  %135 = vmatpush.msra.mxu0 0.0
  %136 = vmatpush.msra.mxu0 0.0
  %137 = vmatpush.msra.mxu0 0.0
  %138 = vmatpush.msra.mxu0 0.0
  %139 = vmatpush.msra.mxu0 0.0
  %140 = vmatpush.msra.mxu0 0.0
  %141 = vmatpush.msra.mxu0 0.0
  %142 = vmatpush.msra.mxu0 %v112
  %143 = vmatpush.msra.mxu0 %v111
  %144 = vmatpush.msra.mxu0 %v110
  %145 = vmatpush.msra.mxu0 %v109
  %146 = vmatmul.f32.gmra.mxu0 %v119
  %v147 = vpop.f32.mrf.mxu0
  %v148 = vadd.f32 0.0, %v147
  %149 = vmatmul.f32.gmra.mxu0 %v122
  %v150 = vpop.f32.mrf.mxu0
  %v151 = vadd.f32 0.0, %v150
  %152 = vmatmul.f32.gmra.mxu0 %v125
  %v153 = vpop.f32.mrf.mxu0
  %v154 = vadd.f32 0.0, %v153
  %155 = vmatmul.f32.gmra.mxu0 %v128
  %v156 = vpop.f32.mrf.mxu0
  %v157 = vadd.f32 0.0, %v156
  %158 = vdwg.mxu0
  %v159 = vlaneseq
  %v160 = vand.u32 %v159, 127
  %s161 = sld [smem:[#allocation3]]
  %s162 = smul.u32 0, 128
  %s163 = ssub.s32 %s161, %s162
  %v164 = vstv %s163
  %vm165 = vcmp.lt.s32.totalorder %v160, %v164
  %v166 = vsel %vm165, %v148, 0.0
  %v167 = vsel %vm165, %v151, 0.0
  %v168 = vsel %vm165, %v154, 0.0
  %v169 = vsel %vm165, %v157, 0.0
  %v170 = vld [vmem:[%s7] sm:$0xff]
  %v171 = vld [vmem:[%s7 + $0x8] sm:$0xff]
  %v172 = vld [vmem:[%s7 + $0x10] sm:$0xff]
  %v173 = vld [vmem:[%s7 + $0x18] sm:$0xff]
  %174 = vadd.xlane.f32.xlu0 %v166
  %v175 = vpop.xlane.xlu0 %174
  %176 = vadd.xlane.f32.xlu0 %v167
  %v177 = vpop.xlane.xlu0 %176
  %178 = vadd.xlane.f32.xlu0 %v168
  %v179 = vpop.xlane.xlu0 %178
  %180 = vadd.xlane.f32.xlu0 %v169
  %v181 = vpop.xlane.xlu0 %180
  %v182 = vadd.f32 %v170, %v175
  %v183 = vadd.f32 %v171, %v177
  %v184 = vadd.f32 %v172, %v179
  %v185 = vadd.f32 %v173, %v181
  %vm186 = vcmask 7168
  %187 = vst.msk [vmem:[%s7] sm:$0xff] %vm186, %v182
  %188 = vst.msk [vmem:[%s7 + $0x8] sm:$0xff] %vm186, %v183
  %189 = vst.msk [vmem:[%s7 + $0x10] sm:$0xff] %vm186, %v184
  %190 = vst.msk [vmem:[%s7 + $0x18] sm:$0xff] %vm186, %v185
  %v191 = vld [vmem:[%s7] sm:$0xff]
  %v192 = vld [vmem:[%s7 + $0x8] sm:$0xff]
  %v193 = vld [vmem:[%s7 + $0x10] sm:$0xff]
  %v194 = vld [vmem:[%s7 + $0x18] sm:$0xff]
  %v195 = vmul.f32 %v166, %v166
  %v196 = vmul.f32 %v167, %v167
  %v197 = vmul.f32 %v168, %v168
  %v198 = vmul.f32 %v169, %v169
  %199 = vadd.xlane.f32.xlu0 %v195
  %v200 = vpop.xlane.xlu0 %199
  %201 = vadd.xlane.f32.xlu0 %v196
  %v202 = vpop.xlane.xlu0 %201
  %203 = vadd.xlane.f32.xlu0 %v197
  %v204 = vpop.xlane.xlu0 %203
  %205 = vadd.xlane.f32.xlu0 %v198
  %v206 = vpop.xlane.xlu0 %205
  %v207 = vadd.f32 %v191, %v200
  %v208 = vadd.f32 %v192, %v202
  %v209 = vadd.f32 %v193, %v204
  %v210 = vadd.f32 %v194, %v206
  %vm211 = vcmask 15368
  %212 = vst.msk [vmem:[%s7] sm:$0xff] %vm211, %v207
  %213 = vst.msk [vmem:[%s7 + $0x8] sm:$0xff] %vm211, %v208
  %214 = vst.msk [vmem:[%s7 + $0x10] sm:$0xff] %vm211, %v209
  %215 = vst.msk [vmem:[%s7 + $0x18] sm:$0xff] %vm211, %v210
  // Predicated region
  $region30: #{fully_connected_forward.2} parent=0 // pred_check
    %p216 = pneg %p25
  $region31: #{fully_connected_forward.2} parent=0 // pred_check_branch
    %218 = sbr.rel (%p216) target = $region33
  $region32: #{fully_connected_forward.2} parent=0 // pred_region
    %s219 = sld [smem:[#allocation3]]
    %s220 = scvt.s32.f32 %s219
    %v221 = vld [vmem:[%s7] sm:$0xff]
    %v222 = vld [vmem:[%s7 + $0x8] sm:$0xff]
    %v223 = vld [vmem:[%s7 + $0x10] sm:$0xff]
    %v224 = vld [vmem:[%s7 + $0x18] sm:$0xff]
    %v225 = vstv %s220
    %v226 = vrcp.pop %v225
    %v227 = vmul.f32 %v225, %v226
    %v228 = vsub.f32 1.0, %v227
    %v229 = vmul.f32 %v226, %v228
    %v230 = vadd.f32 %v226, %v229
    %vm231 = vweird.f32 %v225
    %vm232 = vweird.f32 %v226
    %vm233 = vmor %vm231, %vm232
    %v234 = vsel %vm233, %v226, %v230
    %v235 = vand.u32 2147483647, %v225
    %vm236 = vcmp.eq.f32.partialorder %v235, 8.507059e+37
    %v237 = vand.u32 %v225, 2147483648
    %v238 = vor.u32 1.1754944e-38, %v237
    %v239 = vsel %vm236, %v238, %v234
    %v240 = vmul.f32 %v221, %v239
    %v241 = vmul.f32 %v222, %v239
    %v242 = vmul.f32 %v223, %v239
    %v243 = vmul.f32 %v224, %v239
    %v244 = vmul.f32 %v240, %v240
    %v245 = vmul.f32 %v241, %v241
    %v246 = vmul.f32 %v242, %v242
    %v247 = vmul.f32 %v243, %v243
    %252 = vrot.lane.b32.xlu0 %v244, 1
    %v253 = vpop.permute.xlu0 %252
    %254 = vrot.lane.b32.xlu0 %v245, 1
    %v255 = vpop.permute.xlu0 %254
    %256 = vrot.lane.b32.xlu0 %v246, 1
    %v257 = vpop.permute.xlu0 %256
    %258 = vrot.lane.b32.xlu0 %v247, 1
    %v259 = vpop.permute.xlu0 %258
    %v264 = vsub.f32 %v240, %v253
    %v265 = vsub.f32 %v241, %v255
    %v266 = vsub.f32 %v242, %v257
    %v267 = vsub.f32 %v243, %v259
    %v268 = vld [vmem:[%s5] sm:$0xff]
    %v269 = vld [vmem:[%s5 + $0x8] sm:$0xff]
    %v270 = vld [vmem:[%s5 + $0x10] sm:$0xff]
    %v271 = vld [vmem:[%s5 + $0x18] sm:$0xff]
    %v272 = vadd.f32 %v264, 1e-05
    %v273 = vadd.f32 %v265, 1e-05
    %v274 = vadd.f32 %v266, 1e-05
    %v275 = vadd.f32 %v267, 1e-05
    %v276 = vrsqrt.pop %v272
    %v277 = vmul.f32 %v276, %v272
    %v278 = vmul.f32 %v277, %v276
    %v279 = vmul.f32 0.5, %v278
    %v280 = vsub.f32 1.5, %v279
    %v281 = vmul.f32 %v276, %v280
    %vm282 = vweird.f32 %v272
    %vm283 = vweird.f32 %v276
    %vm284 = vmor %vm282, %vm283
    %v285 = vsel %vm284, %v276, %v281
    %v286 = vrsqrt.pop %v273
    %v287 = vmul.f32 %v286, %v273
    %v288 = vmul.f32 %v287, %v286
    %v289 = vmul.f32 0.5, %v288
    %v290 = vsub.f32 1.5, %v289
    %v291 = vmul.f32 %v286, %v290
    %vm292 = vweird.f32 %v273
    %vm293 = vweird.f32 %v286
    %vm294 = vmor %vm292, %vm293
    %v295 = vsel %vm294, %v286, %v291
    %v296 = vrsqrt.pop %v274
    %v297 = vmul.f32 %v296, %v274
    %v298 = vmul.f32 %v297, %v296
    %v299 = vmul.f32 0.5, %v298
    %v300 = vsub.f32 1.5, %v299
    %v301 = vmul.f32 %v296, %v300
    %vm302 = vweird.f32 %v274
    %vm303 = vweird.f32 %v296
    %vm304 = vmor %vm302, %vm303
    %v305 = vsel %vm304, %v296, %v301
    %v306 = vrsqrt.pop %v275
    %v307 = vmul.f32 %v306, %v275
    %v308 = vmul.f32 %v307, %v306
    %v309 = vmul.f32 0.5, %v308
    %v310 = vsub.f32 1.5, %v309
    %v311 = vmul.f32 %v306, %v310
    %vm312 = vweird.f32 %v275
    %vm313 = vweird.f32 %v306
    %vm314 = vmor %vm312, %vm313
    %v315 = vsel %vm314, %v306, %v311
    %320 = vrot.lane.b32.xlu0 %v285, 127
    %v321 = vpop.permute.xlu0 %320
    %322 = vrot.lane.b32.xlu0 %v295, 127
    %v323 = vpop.permute.xlu0 %322
    %324 = vrot.lane.b32.xlu0 %v305, 127
    %v325 = vpop.permute.xlu0 %324
    %326 = vrot.lane.b32.xlu0 %v315, 127
    %v327 = vpop.permute.xlu0 %326
    %v332 = vmul.f32 %v268, %v321
    %v333 = vmul.f32 %v269, %v323
    %v334 = vmul.f32 %v270, %v325
    %v335 = vmul.f32 %v271, %v327
    %v336 = vld [vmem:[%s6] sm:$0xff]
    %v337 = vld [vmem:[%s6 + $0x8] sm:$0xff]
    %v338 = vld [vmem:[%s6 + $0x10] sm:$0xff]
    %v339 = vld [vmem:[%s6 + $0x18] sm:$0xff]
    %v340 = vmul.f32 %v240, %v332
    %v341 = vmul.f32 %v241, %v333
    %v342 = vmul.f32 %v242, %v334
    %v343 = vmul.f32 %v243, %v335
    %v344 = vsub.f32 %v336, %v340
    %v345 = vsub.f32 %v337, %v341
    %v346 = vsub.f32 %v338, %v342
    %v347 = vsub.f32 %v339, %v343
    %348 = vst.msk [vmem:[%s7] sm:$0xff] %vm186, %v332
    %349 = vst.msk [vmem:[%s7 + $0x8] sm:$0xff] %vm186, %v333
    %350 = vst.msk [vmem:[%s7 + $0x10] sm:$0xff] %vm186, %v334
    %351 = vst.msk [vmem:[%s7 + $0x18] sm:$0xff] %vm186, %v335
    %356 = vrot.lane.b32.xlu0 %v344, 1
    %v357 = vpop.permute.xlu0 %356
    %358 = vrot.lane.b32.xlu0 %v345, 1
    %v359 = vpop.permute.xlu0 %358
    %360 = vrot.lane.b32.xlu0 %v346, 1
    %v361 = vpop.permute.xlu0 %360
    %362 = vrot.lane.b32.xlu0 %v347, 1
    %v363 = vpop.permute.xlu0 %362
    %368 = vst.msk [vmem:[%s7] sm:$0xff] %vm211, %v357
    %369 = vst.msk [vmem:[%s7 + $0x8] sm:$0xff] %vm211, %v359
    %370 = vst.msk [vmem:[%s7 + $0x10] sm:$0xff] %vm211, %v361
    %371 = vst.msk [vmem:[%s7 + $0x18] sm:$0xff] %vm211, %v363
  $region33: #{fully_connected_forward.2} parent=0 // pred_fallthru
    _
  // Predicated region
  $region34: #{fully_connected_forward.2} parent=0 // pred_check
    _
  $region35: #{fully_connected_forward.2} parent=0 // pred_check_branch
    %373 = sbr.rel (0) target = $region37
  $region36: #{fully_connected_forward.2} parent=0 // pred_region
    _
  $region37: #{fully_connected_forward.2} parent=0 // pred_fallthru
    _
  // Predicated region
  $region38: #{fully_connected_forward.2} parent=0 // pred_check
    _
  $region39: #{fully_connected_forward.2} parent=0 // pred_check_branch
    %375 = sbr.rel (0) target = $region41
  $region40: #{fully_connected_forward.2} parent=0 // pred_region
    _
  $region41: #{fully_connected_forward.2} parent=0 // pred_fallthru
    _

// kernel: fully_connected_forward.3
$region0: #{fully_connected_forward.3}
  #allocation0 [shape = 'u32[]', space=smem, size = 0x4, offset = 0x4, fixed_abs, tag = 'smem constant byte address 0x4 - core index']
  #allocation1 [shape = 'u32[72,128]{1,0:T(1,128)}', space=vmem, size = 0x9000, scoped, tag = 'internal scratch']
  %s0 = inlined_call_operand.vmem [shape: f32[4,128], index: 0, kind: input, shape index: {}]
  %s1 = inlined_call_operand.vmem [shape: f32[32,4], index: 1, kind: input, shape index: {}]
  %s2 = inlined_call_operand.vmem [shape: f32[32,1], index: 2, kind: input, shape index: {}]
  %s3 = inlined_call_operand.vmem [shape: f32[32,32], index: 3, kind: input, shape index: {}]
  %s4 = inlined_call_operand.vmem [shape: f32[32,2], index: 4, kind: input, shape index: {}]
  %s5 = inlined_call_operand.vmem [shape: f32[2,32], index: 5, kind: input, shape index: {}]
  %s6 = inlined_call_operand.vmem [shape: f32[2,1], index: 6, kind: input, shape index: {}]
  %s7 = inlined_call_operand.vmem [shape: f32[2,128], index: 7, kind: output, shape index: {}]
  %s8 = sld [smem:[#allocation0]]
  $region38: #{fully_connected_forward.3} parent=0
    _
  %s10 = ssub.s32 1, %s8
  %s11 = scalar_select 0, %s10, %s8
  // Predicated region
  $region2: #{fully_connected_forward.3} parent=0 // pred_check
    _
  $region3: #{fully_connected_forward.3} parent=0 // pred_check_branch
    %13 = sbr.rel (0) target = $region5
  $region4: #{fully_connected_forward.3} parent=0 // pred_region
    _
  $region5: #{fully_connected_forward.3} parent=0 // pred_fallthru
    _
  // Predicated region
  $region6: #{fully_connected_forward.3} parent=0 // pred_check
    _
  $region7: #{fully_connected_forward.3} parent=0 // pred_check_branch
    %15 = sbr.rel (0) target = $region9
  $region8: #{fully_connected_forward.3} parent=0 // pred_region
    _
  $region9: #{fully_connected_forward.3} parent=0 // pred_fallthru
    _
  // Predicated region
  $region10: #{fully_connected_forward.3} parent=0 // pred_check
    _
  $region11: #{fully_connected_forward.3} parent=0 // pred_check_branch
    %17 = sbr.rel (0) target = $region13
  $region12: #{fully_connected_forward.3} parent=0 // pred_region
    _
  $region13: #{fully_connected_forward.3} parent=0 // pred_fallthru
    _
  // Predicated region
  $region14: #{fully_connected_forward.3} parent=0 // pred_check
    _
  $region15: #{fully_connected_forward.3} parent=0 // pred_check_branch
    %19 = sbr.rel (0) target = $region17
  $region16: #{fully_connected_forward.3} parent=0 // pred_region
    _
  $region17: #{fully_connected_forward.3} parent=0 // pred_fallthru
    _
  // Predicated region
  $region18: #{fully_connected_forward.3} parent=0 // pred_check
    _
  $region19: #{fully_connected_forward.3} parent=0 // pred_check_branch
    %21 = sbr.rel (0) target = $region21
  $region20: #{fully_connected_forward.3} parent=0 // pred_region
    _
  $region21: #{fully_connected_forward.3} parent=0 // pred_fallthru
    _
  // Predicated region
  $region22: #{fully_connected_forward.3} parent=0 // pred_check
    _
  $region23: #{fully_connected_forward.3} parent=0 // pred_check_branch
    %23 = sbr.rel (0) target = $region25
  $region24: #{fully_connected_forward.3} parent=0 // pred_region
    _
  $region25: #{fully_connected_forward.3} parent=0 // pred_fallthru
    _
  // Predicated region
  $region26: #{fully_connected_forward.3} parent=0 // pred_check
    _
  $region27: #{fully_connected_forward.3} parent=0 // pred_check_branch
    %25 = sbr.rel (0) target = $region29
  $region28: #{fully_connected_forward.3} parent=0 // pred_region
    _
  $region29: #{fully_connected_forward.3} parent=0 // pred_fallthru
    _
  %v26 = vld [vmem:[%s0] sm:$0xf]
  %v27 = vld [vmem:[%s1] sm:$0xff]
  %v28 = vld [vmem:[%s1 + $0x8] sm:$0xff]
  %v29 = vld [vmem:[%s1 + $0x10] sm:$0xff]
  %v30 = vld [vmem:[%s1 + $0x18] sm:$0xff]
  %v31 = vld [vmem:[%s2] sm:$0xff]
  %v32 = vld [vmem:[%s2 + $0x8] sm:$0xff]
  %v33 = vld [vmem:[%s2 + $0x10] sm:$0xff]
  %v34 = vld [vmem:[%s2 + $0x18] sm:$0xff]
  %36 = vset.pattern.permute.xlu0 0
  %37 = vperm.xlu0 %36, %v31
  %v38 = vpop.permute.xlu0 %37
  %41 = vset.pattern.permute.xlu0 0
  %42 = vperm.xlu0 %41, %v32
  %v43 = vpop.permute.xlu0 %42
  %46 = vset.pattern.permute.xlu0 0
  %47 = vperm.xlu0 %46, %v33
  %v48 = vpop.permute.xlu0 %47
  %51 = vset.pattern.permute.xlu0 0
  %52 = vperm.xlu0 %51, %v34
  %v53 = vpop.permute.xlu0 %52
  %vm55 = vcmask 31744
  %v57 = vsel %vm55, %v27, 0
  %v60 = vsel %vm55, %v28, 0
  %v63 = vsel %vm55, %v29, 0
  %v66 = vsel %vm55, %v30, 0
  %vm68 = vcmask 1043456
  %v70 = vsel %vm68, %v26, 0
  %72 = vmatpush.msra.mxu0 0.0
  %73 = vmatpush.msra.mxu0 0.0
  %74 = vmatpush.msra.mxu0 0.0
  %75 = vmatpush.msra.mxu0 0.0
  %76 = vmatpush.msra.mxu0 0.0
  %77 = vmatpush.msra.mxu0 0.0
  %78 = vmatpush.msra.mxu0 0.0
  %79 = vmatpush.msra.mxu0 0.0
  %80 = vmatpush.msra.mxu0 0.0
  %81 = vmatpush.msra.mxu0 0.0
  %82 = vmatpush.msra.mxu0 0.0
  %83 = vmatpush.msra.mxu0 0.0
  %84 = vmatpush.msra.mxu0 0.0
  %85 = vmatpush.msra.mxu0 0.0
  %86 = vmatpush.msra.mxu0 0.0
  %87 = vmatpush.msra.mxu0 %v70
  %88 = vmatmul.f32.gmra.mxu0 %v57
  %v89 = vpop.f32.mrf.mxu0
  %v90 = vadd.f32 %v38, %v89
  %91 = vmatmul.f32.gmra.mxu0 %v60
  %v92 = vpop.f32.mrf.mxu0
  %v93 = vadd.f32 %v43, %v92
  %94 = vmatmul.f32.gmra.mxu0 %v63
  %v95 = vpop.f32.mrf.mxu0
  %v96 = vadd.f32 %v48, %v95
  %97 = vmatmul.f32.gmra.mxu0 %v66
  %v98 = vpop.f32.mrf.mxu0
  %v99 = vadd.f32 %v53, %v98
  %100 = vdwg.mxu0
  %v101 = vmax.f32 %v90, 0.0
  %v102 = vmax.f32 %v93, 0.0
  %v103 = vmax.f32 %v96, 0.0
  %v104 = vmax.f32 %v99, 0.0
  %v105 = vld [vmem:[%s3] sm:$0xff]
  %v106 = vld [vmem:[%s3 + $0x8] sm:$0xff]
  %v107 = vld [vmem:[%s3 + $0x10] sm:$0xff]
  %v108 = vld [vmem:[%s3 + $0x18] sm:$0xff]
  %vm109 = vcmask 261120
  %v111 = vsel %vm109, %v105, 0
  %v114 = vsel %vm109, %v106, 0
  %v117 = vsel %vm109, %v107, 0
  %v120 = vsel %vm109, %v108, 0
  %122 = vmatpush.msra.mxu0 0.0
  %123 = vmatpush.msra.mxu0 0.0
  %124 = vmatpush.msra.mxu0 0.0
  %125 = vmatpush.msra.mxu0 0.0
  %126 = vmatpush.msra.mxu0 0.0
  %127 = vmatpush.msra.mxu0 0.0
  %128 = vmatpush.msra.mxu0 0.0
  %129 = vmatpush.msra.mxu0 0.0
  %130 = vmatpush.msra.mxu0 0.0
  %131 = vmatpush.msra.mxu0 0.0
  %132 = vmatpush.msra.mxu0 0.0
  %133 = vmatpush.msra.mxu0 0.0
  %134 = vmatpush.msra.mxu0 %v104
  %135 = vmatpush.msra.mxu0 %v103
  %136 = vmatpush.msra.mxu0 %v102
  %137 = vmatpush.msra.mxu0 %v101
  %138 = vmatmul.f32.gmra.mxu0 %v111
  %v139 = vpop.f32.mrf.mxu0
  %v140 = vadd.f32 0.0, %v139
  %141 = vmatmul.f32.gmra.mxu0 %v114
  %v142 = vpop.f32.mrf.mxu0
  %v143 = vadd.f32 0.0, %v142
  %144 = vmatmul.f32.gmra.mxu0 %v117
  %v145 = vpop.f32.mrf.mxu0
  %v146 = vadd.f32 0.0, %v145
  %147 = vmatmul.f32.gmra.mxu0 %v120
  %v148 = vpop.f32.mrf.mxu0
  %v149 = vadd.f32 0.0, %v148
  %150 = vdwg.mxu0
  %v151 = vld [vmem:[%s4] sm:$0xff]
  %v152 = vld [vmem:[%s4 + $0x8] sm:$0xff]
  %v153 = vld [vmem:[%s4 + $0x10] sm:$0xff]
  %v154 = vld [vmem:[%s4 + $0x18] sm:$0xff]
  %156 = vset.pattern.permute.xlu0 0
  %157 = vperm.xlu0 %156, %v151
  %v158 = vpop.permute.xlu0 %157
  %161 = vset.pattern.permute.xlu0 0
  %162 = vperm.xlu0 %161, %v152
  %v163 = vpop.permute.xlu0 %162
  %166 = vset.pattern.permute.xlu0 0
  %167 = vperm.xlu0 %166, %v153
  %v168 = vpop.permute.xlu0 %167
  %171 = vset.pattern.permute.xlu0 0
  %172 = vperm.xlu0 %171, %v154
  %v173 = vpop.permute.xlu0 %172
  %v175 = vmul.f32 %v140, %v158
  %v176 = vmul.f32 %v143, %v163
  %v177 = vmul.f32 %v146, %v168
  %v178 = vmul.f32 %v149, %v173
  %179 = vset.pattern.permute.xlu0 1
  %180 = vperm.xlu0 %179, %v151
  %v181 = vpop.permute.xlu0 %180
  %183 = vset.pattern.permute.xlu0 1
  %184 = vperm.xlu0 %183, %v152
  %v185 = vpop.permute.xlu0 %184
  %187 = vset.pattern.permute.xlu0 1
  %188 = vperm.xlu0 %187, %v153
  %v189 = vpop.permute.xlu0 %188
  %191 = vset.pattern.permute.xlu0 1
  %192 = vperm.xlu0 %191, %v154
  %v193 = vpop.permute.xlu0 %192
  %v195 = vadd.f32 %v175, %v181
  %v196 = vadd.f32 %v176, %v185
  %v197 = vadd.f32 %v177, %v189
  %v198 = vadd.f32 %v178, %v193
  %v199 = vmax.f32 %v195, 0.0
  %v200 = vmax.f32 %v196, 0.0
  %v201 = vmax.f32 %v197, 0.0
  %v202 = vmax.f32 %v198, 0.0
  %v203 = vld [vmem:[%s5] sm:$0x3]
  %v204 = vld [vmem:[%s6] sm:$0x3]
  %206 = vset.pattern.permute.xlu0 0
  %207 = vperm.xlu0 %206, %v204
  %v208 = vpop.permute.xlu0 %207
  %v211 = vsel %vm109, %v203, 0
  %213 = vmatpush.msra.mxu0 0.0
  %214 = vmatpush.msra.mxu0 0.0
  %215 = vmatpush.msra.mxu0 0.0
  %216 = vmatpush.msra.mxu0 0.0
  %217 = vmatpush.msra.mxu0 0.0
  %218 = vmatpush.msra.mxu0 0.0
  %219 = vmatpush.msra.mxu0 0.0
  %220 = vmatpush.msra.mxu0 0.0
  %221 = vmatpush.msra.mxu0 0.0
  %222 = vmatpush.msra.mxu0 0.0
  %223 = vmatpush.msra.mxu0 0.0
  %224 = vmatpush.msra.mxu0 0.0
  %225 = vmatpush.msra.mxu0 %v202
  %226 = vmatpush.msra.mxu0 %v201
  %227 = vmatpush.msra.mxu0 %v200
  %228 = vmatpush.msra.mxu0 %v199
  %229 = vmatmul.f32.gmra.mxu0 %v211
  %v230 = vpop.f32.mrf.mxu0
  %v231 = vadd.f32 %v208, %v230
  %232 = vdwg.mxu0
  %v233 = vxor.u32 %v231, 2147483648
  %v234 = vmul.f32 %v233, 1.442695
  %v235 = vpow.pop %v234
  %v236 = vadd.f32 %v235, 1.0
  %v237 = vrcp.pop %v236
  %v238 = vmul.f32 %v236, %v237
  %v239 = vsub.f32 1.0, %v238
  %v240 = vmul.f32 %v237, %v239
  %v241 = vadd.f32 %v237, %v240
  %vm242 = vweird.f32 %v236
  %vm243 = vweird.f32 %v237
  %vm244 = vmor %vm242, %vm243
  %v245 = vsel %vm244, %v237, %v241
  %v246 = vand.u32 2147483647, %v236
  %vm247 = vcmp.eq.f32.partialorder %v246, 8.507059e+37
  %v248 = vand.u32 %v236, 2147483648
  %v249 = vor.u32 1.1754944e-38, %v248
  %v250 = vsel %vm247, %v249, %v245
  %v251 = vmul.f32 1.0, %v250
  %v252 = vmul.f32 %v251, 2.0
  %253 = vst [vmem:[%s7] sm:$0x3] %v252
  // Predicated region
  $region30: #{fully_connected_forward.3} parent=0 // pred_check
    _
  $region31: #{fully_connected_forward.3} parent=0 // pred_check_branch
    %255 = sbr.rel (0) target = $region33
  $region32: #{fully_connected_forward.3} parent=0 // pred_region
    _
  $region33: #{fully_connected_forward.3} parent=0 // pred_fallthru
    _
  // Predicated region
  $region34: #{fully_connected_forward.3} parent=0 // pred_check
    _
  $region35: #{fully_connected_forward.3} parent=0 // pred_check_branch
    %257 = sbr.rel (0) target = $region37
  $region36: #{fully_connected_forward.3} parent=0 // pred_region
    _
  $region37: #{fully_connected_forward.3} parent=0 // pred_fallthru
    _

</llo_original>
